<compile_context>
chip_gen: v5e
topology: v5e:2x2
jax: 0.10.0
libtpu: 0.0.40
codegen_flags: <defaults>
</compile_context>

<pallas_src>
import jax
import jax.numpy as jnp
from jax import lax
from jax.experimental import pallas as pl
from jax.experimental.pallas import tpu as pltpu

_LANE = 128          # TPU lane width
_MAX_COLS = 512      # lane-dense slab width (multiple of 128)
_MAX_TILE_R = 512    # rows per grid step: 512 x 512 x 4B = 1 MiB per buffer


def _uniform_from_index(gidx_i32, seed_u32, salt_u32):
    """Counter-based uniform in [0, 1 - 2^-23] from a global element index."""
    x = lax.bitcast_convert_type(gidx_i32, jnp.uint32)
    x = x ^ salt_u32
    x = x * jnp.uint32(0x9E3779B1) + seed_u32
    x = (x ^ (x >> 16)) * jnp.uint32(0x85EBCA6B)
    x = (x ^ (x >> 13)) * jnp.uint32(0xC2B2AE35)
    x = x ^ (x >> 16)
    # 23 random mantissa bits under exponent 127 -> float in [1, 2), minus 1.
    bits = (x >> 9) | jnp.uint32(0x3F800000)
    return lax.bitcast_convert_type(bits, jnp.float32) - 1.0


def _global_index(shape):
    """Global linear index of every element of the current tile (int32)."""
    rows, cols = shape
    row = lax.broadcasted_iota(jnp.int32, shape, 0) + pl.program_id(0) * rows
    col = lax.broadcasted_iota(jnp.int32, shape, 1)
    return row * cols + col


def _train_kernel(seed_ref, p_ref, o_ref):
    # Relaxed Bernoulli (training branch).  tau cancels exactly:
    #   no = p/(la*tau), de = p/(la*tau) + (1-p)/(lb*tau)
    #   no/de = p*lb / (p*lb + (1-p)*la)
    gidx = _global_index(p_ref.shape)
    seed_u = lax.bitcast_convert_type(seed_ref[0], jnp.uint32)

    u_a = _uniform_from_index(gidx, seed_u, jnp.uint32(0x2545F491))
    u_b = _uniform_from_index(gidx, seed_u, jnp.uint32(0x9E3779B9))

    p = p_ref[...].astype(jnp.float32)
    la = -jnp.log(jnp.maximum(u_a, 1e-7))   # > 0
    lb = -jnp.log(jnp.maximum(u_b, 1e-7))   # > 0

    num = p * lb
    den = num + (1.0 - p) * la
    o_ref[...] = (num / den).astype(o_ref.dtype)


def _eval_kernel(seed_ref, p_ref, o_ref):
    # Hard Bernoulli sampling (eval branch).  u is strictly inside [0, 1),
    # so the explicit clamp of p is unnecessary: u < p already yields 0 for
    # p <= 0 and 1 for p >= 1.
    gidx = _global_index(p_ref.shape)
    seed_u = lax.bitcast_convert_type(seed_ref[0], jnp.uint32)
    u = _uniform_from_index(gidx, seed_u, jnp.uint32(0x2545F491))
    p = p_ref[...].astype(jnp.float32)
    o_ref[...] = (u < p).astype(o_ref.dtype)


def _run_2d(kernel, slab, seed_arr, tile_r):
    R, C = slab.shape
    return pl.pallas_call(
        kernel,
        out_shape=jax.ShapeDtypeStruct((R, C), slab.dtype),
        grid_spec=pltpu.PrefetchScalarGridSpec(
            num_scalar_prefetch=1,
            grid=(R // tile_r,),
            in_specs=[pl.BlockSpec((tile_r, C), lambda i, seed_ref: (i, 0))],
            out_specs=pl.BlockSpec((tile_r, C), lambda i, seed_ref: (i, 0)),
        ),
        compiler_params=pltpu.CompilerParams(
            dimension_semantics=("parallel",)),
    )(seed_arr, slab)


def _layout(n):
    """Pick a lane-dense (rows, cols) slab and a row tile for n elements."""
    cols = _MAX_COLS if n >= _MAX_COLS else _LANE
    rows = pl.cdiv(n, cols)
    if rows <= _MAX_TILE_R:
        tile_r = rows                      # one full-array block
    else:
        tile_r = _MAX_TILE_R
        rows = pl.cdiv(rows, tile_r) * tile_r
    return rows, cols, tile_r


class SampleBernoulliPallas:
    """JAX/Pallas equivalent of utils/sampler.py::Sample_Bernoulli."""

    def __init__(self, tau):
        # tau cancels exactly in no_logits/de_logits of the reference module,
        # so the output is independent of it; kept for API parity.
        self.tau = float(tau)
        self.training = True

    def __call__(self, probs, seed=0):
        orig_shape = probs.shape
        n = probs.size
        rows, cols, tile_r = _layout(n)

        flat = probs.reshape(-1)
        pad = rows * cols - n
        if pad:
            flat = jnp.concatenate(
                [flat, jnp.full((pad,), 0.5, dtype=flat.dtype)])
        slab = flat.reshape(rows, cols)

        seed_arr = jnp.array([seed], dtype=jnp.int32)
        kernel = _train_kernel if self.training else _eval_kernel
        out = _run_2d(kernel, slab, seed_arr, tile_r)
        return out.reshape(-1)[:n].reshape(orig_shape)


if __name__ == "__main__":
    key = jax.random.PRNGKey(0)
    B, C, H, W = 2, 4, 16, 16
    probs = jax.random.uniform(key, (B, C, H, W), dtype=jnp.float32)

    sampler = SampleBernoulliPallas(tau=0.5)

    # training branch (relaxed Bernoulli in (0, 1))
    sampler.training = True
    soft = sampler(probs, seed=0)
    soft = jax.block_until_ready(soft)
    assert soft.shape == (B, C, H, W)
    assert bool(jnp.all(jnp.isfinite(soft)))
    assert bool(jnp.all((soft >= 0.0) & (soft <= 1.0)))

    # eval branch (hard 0/1 samples)
    sampler.training = False
    hard = sampler(probs, seed=1)
    hard = jax.block_until_ready(hard)
    assert hard.shape == (B, C, H, W)
    assert bool(jnp.all((hard == 0.0) | (hard == 1.0)))

    print("KERNEL_OK")
</pallas_src>

<mosaic_0001>
module attributes {stable_mosaic.version = 11 : i64} {
  func.func @_train_kernel(%arg0: i32, %arg1: memref<1xi32, #tpu.memory_space<smem>>, %arg2: memref<4x512xf32, #tpu.memory_space<vmem>>, %arg3: memref<4x512xf32, #tpu.memory_space<vmem>>) attributes {dimension_semantics = [#tpu.dimension_semantics<parallel>], iteration_bounds = array<i64: 1>, scalar_prefetch = 1 : i64, scratch_operands = 0 : i64, tpu.core_type = #tpu.core_type<tc>, window_params = [{transform_indices = @transform_0, window_bounds = array<i64: 4, 512>}, {transform_indices = @transform_1, window_bounds = array<i64: 4, 512>}]} {
    %0 = tpu.iota {dimensions = array<i32: 0>} : vector<4x512xi32>
    %c4_i32 = arith.constant 4 : i32
    %1 = arith.muli %arg0, %c4_i32 : i32
    %2 = vector.broadcast %1 : i32 to vector<4x512xi32>
    %3 = arith.addi %0, %2 : vector<4x512xi32>
    %4 = tpu.iota {dimensions = array<i32: 1>} : vector<4x512xi32>
    %c512_i32 = arith.constant 512 : i32
    %5 = vector.broadcast %c512_i32 : i32 to vector<4x512xi32>
    %6 = arith.muli %3, %5 : vector<4x512xi32>
    %7 = arith.addi %6, %4 : vector<4x512xi32>
    %c0 = arith.constant 0 : index
    %8 = memref.load %arg1[%c0] : memref<1xi32, #tpu.memory_space<smem>>
    %9 = arith.bitcast %8 : i32 to i32
    %10 = tpu.bitcast %7 : vector<4x512xi32> -> vector<4x512xi32>
    %c625341585_i32 = arith.constant 625341585 : i32
    %11 = vector.broadcast %c625341585_i32 : i32 to vector<4x512xi32>
    %12 = arith.xori %10, %11 : vector<4x512xi32>
    %c-1640531535_i32 = arith.constant -1640531535 : i32
    %13 = vector.broadcast %c-1640531535_i32 : i32 to vector<4x512xi32>
    %14 = arith.muli %12, %13 : vector<4x512xi32>
    %15 = vector.broadcast %9 : i32 to vector<4x512xi32>
    %16 = arith.addi %14, %15 : vector<4x512xi32>
    %c16_i32 = arith.constant 16 : i32
    %17 = vector.broadcast %c16_i32 : i32 to vector<4x512xi32>
    %18 = arith.shrui %16, %17 : vector<4x512xi32>
    %19 = arith.xori %16, %18 : vector<4x512xi32>
    %c-2048144789_i32 = arith.constant -2048144789 : i32
    %20 = vector.broadcast %c-2048144789_i32 : i32 to vector<4x512xi32>
    %21 = arith.muli %19, %20 : vector<4x512xi32>
    %c13_i32 = arith.constant 13 : i32
    %22 = vector.broadcast %c13_i32 : i32 to vector<4x512xi32>
    %23 = arith.shrui %21, %22 : vector<4x512xi32>
    %24 = arith.xori %21, %23 : vector<4x512xi32>
    %c-1028477387_i32 = arith.constant -1028477387 : i32
    %25 = vector.broadcast %c-1028477387_i32 : i32 to vector<4x512xi32>
    %26 = arith.muli %24, %25 : vector<4x512xi32>
    %c16_i32_0 = arith.constant 16 : i32
    %27 = vector.broadcast %c16_i32_0 : i32 to vector<4x512xi32>
    %28 = arith.shrui %26, %27 : vector<4x512xi32>
    %29 = arith.xori %26, %28 : vector<4x512xi32>
    %c9_i32 = arith.constant 9 : i32
    %30 = vector.broadcast %c9_i32 : i32 to vector<4x512xi32>
    %31 = arith.shrui %29, %30 : vector<4x512xi32>
    %c1065353216_i32 = arith.constant 1065353216 : i32
    %32 = vector.broadcast %c1065353216_i32 : i32 to vector<4x512xi32>
    %33 = arith.ori %31, %32 : vector<4x512xi32>
    %34 = tpu.bitcast %33 : vector<4x512xi32> -> vector<4x512xf32>
    %cst = arith.constant 1.000000e+00 : f32
    %35 = vector.broadcast %cst : f32 to vector<4x512xf32>
    %36 = arith.subf %34, %35 : vector<4x512xf32>
    %37 = tpu.bitcast %7 : vector<4x512xi32> -> vector<4x512xi32>
    %c-1640531527_i32 = arith.constant -1640531527 : i32
    %38 = vector.broadcast %c-1640531527_i32 : i32 to vector<4x512xi32>
    %39 = arith.xori %37, %38 : vector<4x512xi32>
    %c-1640531535_i32_1 = arith.constant -1640531535 : i32
    %40 = vector.broadcast %c-1640531535_i32_1 : i32 to vector<4x512xi32>
    %41 = arith.muli %39, %40 : vector<4x512xi32>
    %42 = vector.broadcast %9 : i32 to vector<4x512xi32>
    %43 = arith.addi %41, %42 : vector<4x512xi32>
    %c16_i32_2 = arith.constant 16 : i32
    %44 = vector.broadcast %c16_i32_2 : i32 to vector<4x512xi32>
    %45 = arith.shrui %43, %44 : vector<4x512xi32>
    %46 = arith.xori %43, %45 : vector<4x512xi32>
    %c-2048144789_i32_3 = arith.constant -2048144789 : i32
    %47 = vector.broadcast %c-2048144789_i32_3 : i32 to vector<4x512xi32>
    %48 = arith.muli %46, %47 : vector<4x512xi32>
    %c13_i32_4 = arith.constant 13 : i32
    %49 = vector.broadcast %c13_i32_4 : i32 to vector<4x512xi32>
    %50 = arith.shrui %48, %49 : vector<4x512xi32>
    %51 = arith.xori %48, %50 : vector<4x512xi32>
    %c-1028477387_i32_5 = arith.constant -1028477387 : i32
    %52 = vector.broadcast %c-1028477387_i32_5 : i32 to vector<4x512xi32>
    %53 = arith.muli %51, %52 : vector<4x512xi32>
    %c16_i32_6 = arith.constant 16 : i32
    %54 = vector.broadcast %c16_i32_6 : i32 to vector<4x512xi32>
    %55 = arith.shrui %53, %54 : vector<4x512xi32>
    %56 = arith.xori %53, %55 : vector<4x512xi32>
    %c9_i32_7 = arith.constant 9 : i32
    %57 = vector.broadcast %c9_i32_7 : i32 to vector<4x512xi32>
    %58 = arith.shrui %56, %57 : vector<4x512xi32>
    %c1065353216_i32_8 = arith.constant 1065353216 : i32
    %59 = vector.broadcast %c1065353216_i32_8 : i32 to vector<4x512xi32>
    %60 = arith.ori %58, %59 : vector<4x512xi32>
    %61 = tpu.bitcast %60 : vector<4x512xi32> -> vector<4x512xf32>
    %cst_9 = arith.constant 1.000000e+00 : f32
    %62 = vector.broadcast %cst_9 : f32 to vector<4x512xf32>
    %63 = arith.subf %61, %62 : vector<4x512xf32>
    %c0_10 = arith.constant 0 : index
    %c0_11 = arith.constant 0 : index
    %64 = vector.load %arg2[%c0_10, %c0_11] : memref<4x512xf32, #tpu.memory_space<vmem>>, vector<4x512xf32>
    %cst_12 = arith.constant 1.000000e-07 : f32
    %65 = vector.broadcast %cst_12 : f32 to vector<4x512xf32>
    %66 = arith.maximumf %36, %65 : vector<4x512xf32>
    %67 = math.log %66 : vector<4x512xf32>
    %cst_13 = arith.constant 0.000000e+00 : f32
    %68 = vector.broadcast %cst_13 : f32 to vector<4x512xf32>
    %69 = arith.subf %68, %67 : vector<4x512xf32>
    %cst_14 = arith.constant 1.000000e-07 : f32
    %70 = vector.broadcast %cst_14 : f32 to vector<4x512xf32>
    %71 = arith.maximumf %63, %70 : vector<4x512xf32>
    %72 = math.log %71 : vector<4x512xf32>
    %cst_15 = arith.constant 0.000000e+00 : f32
    %73 = vector.broadcast %cst_15 : f32 to vector<4x512xf32>
    %74 = arith.subf %73, %72 : vector<4x512xf32>
    %75 = arith.mulf %64, %74 : vector<4x512xf32>
    %cst_16 = arith.constant 1.000000e+00 : f32
    %76 = vector.broadcast %cst_16 : f32 to vector<4x512xf32>
    %77 = arith.subf %76, %64 : vector<4x512xf32>
    %78 = arith.mulf %77, %69 : vector<4x512xf32>
    %79 = arith.addf %75, %78 : vector<4x512xf32>
    %80 = arith.divf %75, %79 : vector<4x512xf32>
    %c0_17 = arith.constant 0 : index
    %c0_18 = arith.constant 0 : index
    %81 = vector.load %arg3[%c0_17, %c0_18] : memref<4x512xf32, #tpu.memory_space<vmem>>, vector<4x512xf32>
    tpu.vector_store %arg3[%c0_17, %c0_18], %80 {strides = array<i32>} : memref<4x512xf32, #tpu.memory_space<vmem>>, vector<4x512xf32>,
    return
  }
  func.func @transform_0(%arg0: i32, %arg1: memref<1xi32, #tpu.memory_space<smem>>) -> (i32, i32) {
    %c0_i32 = arith.constant 0 : i32
    %c0_i32_0 = arith.constant 0 : i32
    return %arg0, %c0_i32 : i32, i32
  }
  func.func @transform_1(%arg0: i32, %arg1: memref<1xi32, #tpu.memory_space<smem>>) -> (i32, i32) {
    %c0_i32 = arith.constant 0 : i32
    %c0_i32_0 = arith.constant 0 : i32
    return %arg0, %c0_i32 : i32, i32
  }
}

</mosaic_0001>

<llo_original>
// kernel: tpu_custom_call.1
$region0: #{tpu_custom_call.1}
  #allocation0 [shape = 'u32[]', space=smem, size = 0x4, offset = 0x4, fixed_abs, tag = 'smem constant byte address 0x4 - core index']
  #allocation1 [shape = 'u32[72,128]{1,0:T(1,128)}', space=vmem, size = 0x9000, scoped, tag = 'internal scratch']
  #allocation2 [shape = 's32[1]{0}', space=sflag, size = 0x4, scoped, tag = 'scoped memory for tpu_custom_call.1']
  #allocation3 [shape = 's32[1]{0:T(128)S(6)}', space=smem, size = 0x200, scoped, tag = 'prefetched SMEM operand 0']
  %s0 = inlined_call_operand.<no memory space> [shape: s32[1], index: 0, kind: input, shape index: {}]
  %s1 = inlined_call_operand.hbm [shape: f32[4,512], index: 1, kind: input, shape index: {}]
  %s2 = inlined_call_operand.hbm [shape: f32[4,512], index: 2, kind: output, shape index: {}]
  %s3 = sld [smem:[#allocation0]]
  $region18: #{tpu_custom_call.1} parent=0
    _
  %s5 = ssub.s32 1, %s3
  %s6 = scalar_select 0, %s5, %s3
  %7 = sst [smem:[#allocation3]] %s0
  $region1: #{tpu_custom_call.1} parent=0
    #allocation4 [shape = 'u8[8192]{0}', space=vmem, size = 0x2000, scoped, tag = 'input window, operand 1, single buffered']
    #allocation5 [shape = 's32[1]{0}', space=sflag, size = 0x4, scoped, tag = 'scoped memory for tpu_custom_call.1']
    #allocation6 [shape = 's32[1]{0}', space=sflag, size = 0x4, scoped, tag = 'scoped memory for tpu_custom_call.1']
    #allocation7 [shape = 'u8[8192]{0}', space=vmem, size = 0x2000, scoped, tag = 'output window, operand 0, single buffered']
    %8 = vsyncpa [#allocation5], 0
    %9 = vsyncpa [#allocation6], 0
    // Predicated region
    $region2: #{tpu_custom_call.1} parent=1 // pred_check
      _
    $region3: #{tpu_custom_call.1} parent=1 // pred_check_branch
      %11 = sbr.rel (0) target = $region5
    $region4: #{tpu_custom_call.1} parent=1 // pred_region
      %13 = vsyncadd [#allocation5], 0
      %s15 = sshll.u32 %s1, 4
      %s16 = int_to_ptr.hbm [resolvable:$true] %s15
      %s17 = sshll.u32 [#allocation4], 4
      %s18 = int_to_ptr.vmem [resolvable:$true] %s17
      %20 = dma.hbm_to_vmem [thread:$0]  %s16, 256, %s18, [#allocation5]
    $region5: #{tpu_custom_call.1} parent=1 // pred_fallthru
      _
    // Predicated region
    $region6: #{tpu_custom_call.1} parent=1 // pred_check
      _
    $region7: #{tpu_custom_call.1} parent=1 // pred_check_branch
      %22 = sbr.rel (0) target = $region9
    $region8: #{tpu_custom_call.1} parent=1 // pred_region
      %24 = dma.done [#allocation5], 256
    $region9: #{tpu_custom_call.1} parent=1 // pred_fallthru
      _
    %v25 = vlaneseq
    %v26 = vshrl.u32 %v25, 7
    %s27 = smul.u32 0, 4
    %v28 = vstv %s27
    %v29 = vadd.s32 %v26, %v28
    %v30 = vlaneseq
    %v31 = vand.u32 %v30, 127
    %v32 = vadd.s32 %v31, 128
    %v33 = vadd.s32 %v31, 256
    %v34 = vadd.s32 %v31, 384
    %v35 = vmul.u32 %v29, 512
    %v36 = vadd.s32 %v35, %v31
    %v37 = vadd.s32 %v35, %v32
    %v38 = vadd.s32 %v35, %v33
    %v39 = vadd.s32 %v35, %v34
    %s40 = sld [smem:[#allocation3]]
    %v41 = vxor.u32 %v36, 625341585
    %v42 = vxor.u32 %v37, 625341585
    %v43 = vxor.u32 %v38, 625341585
    %v44 = vxor.u32 %v39, 625341585
    %v45 = vmul.u32 %v41, 2654435761
    %v46 = vmul.u32 %v42, 2654435761
    %v47 = vmul.u32 %v43, 2654435761
    %v48 = vmul.u32 %v44, 2654435761
    %v49 = vstv %s40
    %v50 = vadd.s32 %v45, %v49
    %v51 = vadd.s32 %v46, %v49
    %v52 = vadd.s32 %v47, %v49
    %v53 = vadd.s32 %v48, %v49
    %v54 = vshrl.u32 %v50, 16
    %v55 = vshrl.u32 %v51, 16
    %v56 = vshrl.u32 %v52, 16
    %v57 = vshrl.u32 %v53, 16
    %v58 = vxor.u32 %v50, %v54
    %v59 = vxor.u32 %v51, %v55
    %v60 = vxor.u32 %v52, %v56
    %v61 = vxor.u32 %v53, %v57
    %v62 = vmul.u32 %v58, 2246822507
    %v63 = vmul.u32 %v59, 2246822507
    %v64 = vmul.u32 %v60, 2246822507
    %v65 = vmul.u32 %v61, 2246822507
    %v66 = vshrl.u32 %v62, 13
    %v67 = vshrl.u32 %v63, 13
    %v68 = vshrl.u32 %v64, 13
    %v69 = vshrl.u32 %v65, 13
    %v70 = vxor.u32 %v62, %v66
    %v71 = vxor.u32 %v63, %v67
    %v72 = vxor.u32 %v64, %v68
    %v73 = vxor.u32 %v65, %v69
    %v74 = vmul.u32 %v70, 3266489909
    %v75 = vmul.u32 %v71, 3266489909
    %v76 = vmul.u32 %v72, 3266489909
    %v77 = vmul.u32 %v73, 3266489909
    %v78 = vshrl.u32 %v74, 16
    %v79 = vshrl.u32 %v75, 16
    %v80 = vshrl.u32 %v76, 16
    %v81 = vshrl.u32 %v77, 16
    %v82 = vxor.u32 %v74, %v78
    %v83 = vxor.u32 %v75, %v79
    %v84 = vxor.u32 %v76, %v80
    %v85 = vxor.u32 %v77, %v81
    %v86 = vshrl.u32 %v82, 9
    %v87 = vshrl.u32 %v83, 9
    %v88 = vshrl.u32 %v84, 9
    %v89 = vshrl.u32 %v85, 9
    %v90 = vor.u32 %v86, 1065353216
    %v91 = vor.u32 %v87, 1065353216
    %v92 = vor.u32 %v88, 1065353216
    %v93 = vor.u32 %v89, 1065353216
    %v98 = vsub.f32 %v90, 1.0
    %v99 = vsub.f32 %v91, 1.0
    %v100 = vsub.f32 %v92, 1.0
    %v101 = vsub.f32 %v93, 1.0
    %v102 = vxor.u32 %v36, 2654435769
    %v103 = vxor.u32 %v37, 2654435769
    %v104 = vxor.u32 %v38, 2654435769
    %v105 = vxor.u32 %v39, 2654435769
    %v106 = vmul.u32 %v102, 2654435761
    %v107 = vmul.u32 %v103, 2654435761
    %v108 = vmul.u32 %v104, 2654435761
    %v109 = vmul.u32 %v105, 2654435761
    %v110 = vadd.s32 %v106, %v49
    %v111 = vadd.s32 %v107, %v49
    %v112 = vadd.s32 %v108, %v49
    %v113 = vadd.s32 %v109, %v49
    %v114 = vshrl.u32 %v110, 16
    %v115 = vshrl.u32 %v111, 16
    %v116 = vshrl.u32 %v112, 16
    %v117 = vshrl.u32 %v113, 16
    %v118 = vxor.u32 %v110, %v114
    %v119 = vxor.u32 %v111, %v115
    %v120 = vxor.u32 %v112, %v116
    %v121 = vxor.u32 %v113, %v117
    %v122 = vmul.u32 %v118, 2246822507
    %v123 = vmul.u32 %v119, 2246822507
    %v124 = vmul.u32 %v120, 2246822507
    %v125 = vmul.u32 %v121, 2246822507
    %v126 = vshrl.u32 %v122, 13
    %v127 = vshrl.u32 %v123, 13
    %v128 = vshrl.u32 %v124, 13
    %v129 = vshrl.u32 %v125, 13
    %v130 = vxor.u32 %v122, %v126
    %v131 = vxor.u32 %v123, %v127
    %v132 = vxor.u32 %v124, %v128
    %v133 = vxor.u32 %v125, %v129
    %v134 = vmul.u32 %v130, 3266489909
    %v135 = vmul.u32 %v131, 3266489909
    %v136 = vmul.u32 %v132, 3266489909
    %v137 = vmul.u32 %v133, 3266489909
    %v138 = vshrl.u32 %v134, 16
    %v139 = vshrl.u32 %v135, 16
    %v140 = vshrl.u32 %v136, 16
    %v141 = vshrl.u32 %v137, 16
    %v142 = vxor.u32 %v134, %v138
    %v143 = vxor.u32 %v135, %v139
    %v144 = vxor.u32 %v136, %v140
    %v145 = vxor.u32 %v137, %v141
    %v146 = vshrl.u32 %v142, 9
    %v147 = vshrl.u32 %v143, 9
    %v148 = vshrl.u32 %v144, 9
    %v149 = vshrl.u32 %v145, 9
    %v150 = vor.u32 %v146, 1065353216
    %v151 = vor.u32 %v147, 1065353216
    %v152 = vor.u32 %v148, 1065353216
    %v153 = vor.u32 %v149, 1065353216
    %v158 = vsub.f32 %v150, 1.0
    %v159 = vsub.f32 %v151, 1.0
    %v160 = vsub.f32 %v152, 1.0
    %v161 = vsub.f32 %v153, 1.0
    %v162 = vld [vmem:[#allocation4] sm:$0xff]
    %v163 = vld [vmem:[#allocation4 + $0x8] sm:$0xff]
    %v164 = vmax.f32 %v98, 1e-07
    %v165 = vmax.f32 %v99, 1e-07
    %v166 = vmax.f32 %v100, 1e-07
    %v167 = vmax.f32 %v101, 1e-07
    %v168 = vlog2.pop %v164
    %v169 = vmul.f32 %v168, 0.6931472
    %v170 = vlog2.pop %v165
    %v171 = vmul.f32 %v170, 0.6931472
    %v172 = vlog2.pop %v166
    %v173 = vmul.f32 %v172, 0.6931472
    %v174 = vlog2.pop %v167
    %v175 = vmul.f32 %v174, 0.6931472
    %v176 = vsub.f32 0.0, %v169
    %v177 = vsub.f32 0.0, %v171
    %v178 = vsub.f32 0.0, %v173
    %v179 = vsub.f32 0.0, %v175
    %v180 = vmax.f32 %v158, 1e-07
    %v181 = vmax.f32 %v159, 1e-07
    %v182 = vmax.f32 %v160, 1e-07
    %v183 = vmax.f32 %v161, 1e-07
    %v184 = vlog2.pop %v180
    %v185 = vmul.f32 %v184, 0.6931472
    %v186 = vlog2.pop %v181
    %v187 = vmul.f32 %v186, 0.6931472
    %v188 = vlog2.pop %v182
    %v189 = vmul.f32 %v188, 0.6931472
    %v190 = vlog2.pop %v183
    %v191 = vmul.f32 %v190, 0.6931472
    %v192 = vsub.f32 0.0, %v185
    %v193 = vsub.f32 0.0, %v187
    %v194 = vsub.f32 0.0, %v189
    %v195 = vsub.f32 0.0, %v191
    %v200 = vrot.slane %v193, 4
    %v201 = vrot.slane %v195, 4
    %vm202 = vcmask 1043456
    %v203 = vsel %vm202, %v192, %v200
    %v204 = vsel %vm202, %v194, %v201
    %v207 = vmul.f32 %v162, %v203
    %v208 = vmul.f32 %v163, %v204
    %v209 = vsub.f32 1.0, %v162
    %v210 = vsub.f32 1.0, %v163
    %v215 = vrot.slane %v177, 4
    %v216 = vrot.slane %v179, 4
    %v217 = vsel %vm202, %v176, %v215
    %v218 = vsel %vm202, %v178, %v216
    %v221 = vmul.f32 %v209, %v217
    %v222 = vmul.f32 %v210, %v218
    %v223 = vadd.f32 %v207, %v221
    %v224 = vadd.f32 %v208, %v222
    %v225 = vrcp.pop %v223
    %v226 = vmul.f32 %v223, %v225
    %v227 = vsub.f32 1.0, %v226
    %v228 = vmul.f32 %v225, %v227
    %v229 = vadd.f32 %v225, %v228
    %vm230 = vweird.f32 %v223
    %vm231 = vweird.f32 %v225
    %vm232 = vmor %vm230, %vm231
    %v233 = vsel %vm232, %v225, %v229
    %v234 = vand.u32 2147483647, %v223
    %vm235 = vcmp.eq.f32.partialorder %v234, 8.507059e+37
    %v236 = vand.u32 %v223, 2147483648
    %v237 = vor.u32 1.1754944e-38, %v236
    %v238 = vsel %vm235, %v237, %v233
    %v239 = vmul.f32 %v207, %v238
    %v240 = vrcp.pop %v224
    %v241 = vmul.f32 %v224, %v240
    %v242 = vsub.f32 1.0, %v241
    %v243 = vmul.f32 %v240, %v242
    %v244 = vadd.f32 %v240, %v243
    %vm245 = vweird.f32 %v224
    %vm246 = vweird.f32 %v240
    %vm247 = vmor %vm245, %vm246
    %v248 = vsel %vm247, %v240, %v244
    %v249 = vand.u32 2147483647, %v224
    %vm250 = vcmp.eq.f32.partialorder %v249, 8.507059e+37
    %v251 = vand.u32 %v224, 2147483648
    %v252 = vor.u32 1.1754944e-38, %v251
    %v253 = vsel %vm250, %v252, %v248
    %v254 = vmul.f32 %v208, %v253
    %255 = vst [vmem:[#allocation7] sm:$0xff] %v239
    %256 = vst [vmem:[#allocation7 + $0x8] sm:$0xff] %v254
    // Predicated region
    $region10: #{tpu_custom_call.1} parent=1 // pred_check
      _
    $region11: #{tpu_custom_call.1} parent=1 // pred_check_branch
      %258 = sbr.rel (0) target = $region13
    $region12: #{tpu_custom_call.1} parent=1 // pred_region
      %260 = vsyncadd [#allocation6], 0
      %s262 = sshll.u32 [#allocation7], 4
      %s263 = int_to_ptr.vmem [resolvable:$true] %s262
      %s264 = sshll.u32 %s2, 4
      %s265 = int_to_ptr.hbm [resolvable:$true] %s264
      %267 = dma.vmem_to_hbm [thread:$0]  %s263, 256, %s265, [#allocation6]
    $region13: #{tpu_custom_call.1} parent=1 // pred_fallthru
      _
    // Predicated region
    $region14: #{tpu_custom_call.1} parent=1 // pred_check
      _
    $region15: #{tpu_custom_call.1} parent=1 // pred_check_branch
      %269 = sbr.rel (0) target = $region17
    $region16: #{tpu_custom_call.1} parent=1 // pred_region
      %271 = dma.done [#allocation6], 256
    $region17: #{tpu_custom_call.1} parent=1 // pred_fallthru
      _
    %272 = vsyncpa [#allocation5], 1
    %273 = vsyncpa [#allocation6], 1

</llo_original>
